<compile_context>
chip_gen: v6e
topology: v6e:2x2x1
jax: 0.10.0
libtpu: 0.0.40
codegen_flags: <defaults>
</compile_context>

<pallas_src>
import jax
import jax.numpy as jnp
from jax.experimental import pallas as pl
from jax.experimental.pallas import tpu as pltpu


def _round_up(n, m):
    return ((n + m - 1) // m) * m


def mlp_kernel(x_ref, w1_ref, w2_ref, b2_ref, out_ref):
    # x_ref : (G, BT, K1)  packed inputs: group g holds P consecutive sentence positions'
    #                      features (50 real + 1 bias-one + pad) side by side in the lane dim.
    # w1_ref: (K1, HL)     block-diagonal fc1 weight (fc1 bias folded in), shared by all groups.
    # w2_ref: (G*HL, NP)   fc2 weight re-laid so the (BT, G*HL) hidden slab contracts directly.
    # b2_ref: (1, NP)      f32; padded lanes hold -1e30 so softmax zeroes them exactly.
    # out_ref: (BT, NP)    lane-dense probabilities; only cols [0, 2) are real.
    G = x_ref.shape[0]
    w1 = w1_ref[...]

    # fc1 (+ folded bias) + ReLU per packed group: (BT, K1) x (K1, HL) MXU dot, f32 accumulate.
    # G is tiny and static -> fully unrolled.
    parts = []
    for g in range(G):
        hg = jnp.dot(x_ref[g], w1, preferred_element_type=jnp.float32)
        hg = jnp.maximum(hg, 0.0)                       # ReLU (f32)
        parts.append(hg.astype(w2_ref.dtype))           # cast for the bf16 fc2 dot
    # Lane-concatenate the per-group hidden tiles (each HL = 128-aligned) into one slab ...
    h = parts[0] if G == 1 else jnp.concatenate(parts, axis=-1)        # (BT, G*HL)

    # ... and fuse fc2 into a single deep-contraction matmul (MXU-internal accumulation).
    logits = jnp.dot(h, w2_ref[...], preferred_element_type=jnp.float32) + b2_ref[...]

    # Softmax over the lane dim; padded lanes carry a -1e30 bias -> exp underflows to exact 0.
    m = jnp.max(logits, axis=1, keepdims=True)
    e = jnp.exp(logits - m)
    denom = jnp.sum(e, axis=1, keepdims=True)
    out_ref[...] = (e * pl.reciprocal(denom, approx=True)).astype(out_ref.dtype)


def mlp_forward(x, w1, b1, w2, b2, *, op_dtype=jnp.bfloat16, bt_cap=2048):
    """Forward pass of the PyTorch `Mlp` module.

    x: (B, S, 50); w1: (H, 50); b1: (H,); w2: (2, S*H); b2: (2,).
    Returns (B, 2) softmax probabilities (float32).
    """
    B, S, D = x.shape
    H = w1.shape[0]
    assert w1.shape == (H, D) and w2.shape == (2, S * H)
    f32 = jnp.float32

    # ---- packing geometry -------------------------------------------------
    # Pack P consecutive sentence positions into one fc1 matmul (block-diagonal weight) so the
    # contraction depth is P*64 and the 128 output lanes are all real (vs K=64 / 32 real lanes).
    P = 1
    if H <= 128:
        for cand in range(min(S, 128 // H), 0, -1):
            if S % cand == 0:
                P = cand
                break
    G = S // P                        # number of packed groups (S=8, H=32 -> P=4, G=2)
    Dc = _round_up(D + 1, 64)         # per-position chunk: 50 features + 1 (bias) + pad = 64
    K1 = P * Dc                       # fc1 contraction depth per group (256)
    HL = _round_up(P * H, 128)        # per-group hidden lane width (128, lane-dense)
    NP = 128                          # lane-dense logits/probs, sliced to 2 at the end

    BT = min(_round_up(B, 8), bt_cap)            # batch rows per program (sublane aligned)
    if B > 8 and _round_up(B, BT) // BT < 2:
        BT = _round_up((B + 1) // 2, 8)          # >=2 grid steps -> both TCs on v7x
    Bp = _round_up(B, BT)

    # ---- host-side packing (all relayout here; the kernel does zero reshapes) ----
    # x -> (G, Bp, K1): group g, chunk p holds position s = g*P + p, plus a 1.0 bias column.
    xg = jnp.transpose(x.astype(f32).reshape(B, G, P, D), (1, 0, 2, 3))       # (G, B, P, D)
    ones = jnp.ones((G, B, P, 1), f32)
    padc = jnp.zeros((G, B, P, Dc - D - 1), f32)
    x_core = jnp.concatenate([xg, ones, padc], axis=-1).reshape(G, B, K1)
    xp = jnp.zeros((G, Bp, K1), f32).at[:, :B, :].set(x_core).astype(op_dtype)

    # fc1 weight: block-diagonal, pre-transposed, bias folded into the bias-one row.
    w1p = jnp.zeros((K1, HL), f32)
    for p in range(P):
        w1p = w1p.at[p * Dc:p * Dc + D, p * H:(p + 1) * H].set(w1.T.astype(f32))
        w1p = w1p.at[p * Dc + D, p * H:(p + 1) * H].set(b1.astype(f32))
    w1p = w1p.astype(op_dtype)

    # fc2 weight: rows re-laid to match the packed hidden slab:
    #   slab lane (g*HL + p*H + h)  <->  PyTorch flat index (g*P + p)*H + h.
    w2r = jnp.transpose(w2.astype(f32).reshape(2, S, H), (1, 2, 0))           # (S, H, 2)
    w2g = w2r.reshape(G, P * H, 2)
    w2p = (jnp.zeros((G, HL, NP), f32).at[:, :P * H, :2].set(w2g)
           .reshape(G * HL, NP).astype(op_dtype))

    # fc2 bias: padded logit lanes get -1e30 -> softmax gives them exactly 0.
    b2p = jnp.full((1, NP), -1e30, f32).at[0, :2].set(b2.astype(f32))

    grid = (Bp // BT,)
    out = pl.pallas_call(
        mlp_kernel,
        out_shape=jax.ShapeDtypeStruct((Bp, NP), jnp.float32),
        grid=grid,
        in_specs=[
            pl.BlockSpec((G, BT, K1), lambda i: (0, i, 0)),    # x: batch-tiled
            pl.BlockSpec((K1, HL), lambda i: (0, 0)),          # fc1 weight (resident)
            pl.BlockSpec((G * HL, NP), lambda i: (0, 0)),      # fc2 weight (resident)
            pl.BlockSpec((1, NP), lambda i: (0, 0)),           # fc2 bias (+ -1e30 pad mask)
        ],
        out_specs=pl.BlockSpec((BT, NP), lambda i: (i, 0)),    # lane-dense 128-wide output
        compiler_params=pltpu.CompilerParams(
            dimension_semantics=("parallel",),                 # shard batch tiles across TCs
            vmem_limit_bytes=32 * 1024 * 1024,                 # safe on v5e/v6e/v7x
        ),
    )(xp, w1p, w2p, b2p)

    # Free wrapper-side slice back to the module's (B, 2) output.
    return out[:B, :2]


if __name__ == "__main__":
    # Module hyperparameters (small, consistent with the forward semantics).
    S = 8    # sentence_size
    D = 50   # fc1 in_features (fixed to 50 in the module)
    H = 32   # hid_size

    key = jax.random.PRNGKey(0)
    kx, k1, k2, k3, k4, kx2 = jax.random.split(key, 6)

    # Deterministic parameter init (PyTorch-Linear-style uniform bounds).
    bound1 = 1.0 / (D ** 0.5)
    w1 = jax.random.uniform(k1, (H, D), jnp.float32, -bound1, bound1)
    b1 = jax.random.uniform(k2, (H,), jnp.float32, -bound1, bound1)
    bound2 = 1.0 / ((H * S) ** 0.5)
    w2 = jax.random.uniform(k3, (2, H * S), jnp.float32, -bound2, bound2)
    b2 = jax.random.uniform(k4, (2,), jnp.float32, -bound2, bound2)

    def ref_fn(xin):
        h_ref = jnp.maximum(jnp.einsum("bsd,hd->bsh", xin, w1) + b1, 0.0)
        logits_ref = h_ref.reshape(xin.shape[0], -1) @ w2.T + b2
        return jax.nn.softmax(logits_ref, axis=1)

    # Check 1: small batch (B=2, single grid step).
    x = jax.random.normal(kx, (2, S, D), jnp.float32)
    out = jax.block_until_ready(mlp_forward(x, w1, b1, w2, b2))
    assert out.shape == (2, 2)
    assert jnp.allclose(out, ref_fn(x), atol=2e-2), "mismatch vs reference (B=2)"

    # Check 2: multi-tile batch (B=40 -> 2 batch tiles + padded rows; parallel grid path).
    x2 = jax.random.normal(kx2, (40, S, D), jnp.float32)
    out2 = jax.block_until_ready(mlp_forward(x2, w1, b1, w2, b2))
    assert out2.shape == (40, 2)
    assert jnp.allclose(out2, ref_fn(x2), atol=2e-2), "mismatch vs reference (B=40)"

    print("KERNEL_OK")
</pallas_src>

<mosaic_0001>
module attributes {stable_mosaic.version = 11 : i64} {
  func.func @mlp_kernel(%arg0: i32, %arg1: memref<2x8x256xbf16, #tpu.memory_space<vmem>>, %arg2: memref<256x128xbf16, #tpu.memory_space<vmem>>, %arg3: memref<256x128xbf16, #tpu.memory_space<vmem>>, %arg4: memref<1x128xf32, #tpu.memory_space<vmem>>, %arg5: memref<8x128xf32, #tpu.memory_space<vmem>>) attributes {dimension_semantics = [#tpu.dimension_semantics<parallel>], iteration_bounds = array<i64: 1>, scalar_prefetch = 0 : i64, scratch_operands = 0 : i64, tpu.core_type = #tpu.core_type<tc>, window_params = [{transform_indices = @transform_0, window_bounds = array<i64: 2, 8, 256>}, {pipeline_mode = #tpu.pipeline_mode<synchronous>, transform_indices = @transform_1, window_bounds = array<i64: 256, 128>}, {pipeline_mode = #tpu.pipeline_mode<synchronous>, transform_indices = @transform_2, window_bounds = array<i64: 256, 128>}, {pipeline_mode = #tpu.pipeline_mode<synchronous>, transform_indices = @transform_3, window_bounds = array<i64: 1, 128>}, {transform_indices = @transform_4, window_bounds = array<i64: 8, 128>}]} {
    %c0 = arith.constant 0 : index
    %c0_0 = arith.constant 0 : index
    %0 = vector.load %arg2[%c0, %c0_0] : memref<256x128xbf16, #tpu.memory_space<vmem>>, vector<256x128xbf16>
    %c0_1 = arith.constant 0 : index
    %c0_2 = arith.constant 0 : index
    %c0_3 = arith.constant 0 : index
    %1 = vector.load %arg1[%c0_1, %c0_2, %c0_3] : memref<2x8x256xbf16, #tpu.memory_space<vmem>>, vector<1x8x256xbf16>
    %2 = vector.shape_cast %1 : vector<1x8x256xbf16> to vector<8x256xbf16>
    %cst = arith.constant dense<0.000000e+00> : vector<8x128xf32>
    %3 = tpu.matmul %2, %0, %cst {dimension_numbers = #tpu.dot_dimension_numbers<[1], [0], [0], [1], [0, 0, 1, 1], [], []>} : vector<8x256xbf16>, vector<256x128xbf16>, vector<8x128xf32> -> vector<8x128xf32>
    %cst_4 = arith.constant 0.000000e+00 : f32
    %4 = vector.broadcast %cst_4 : f32 to vector<8x128xf32>
    %5 = arith.maximumf %3, %4 : vector<8x128xf32>
    %6 = arith.truncf %5 : vector<8x128xf32> to vector<8x128xbf16>
    %c1 = arith.constant 1 : index
    %c0_5 = arith.constant 0 : index
    %c0_6 = arith.constant 0 : index
    %7 = vector.load %arg1[%c1, %c0_5, %c0_6] : memref<2x8x256xbf16, #tpu.memory_space<vmem>>, vector<1x8x256xbf16>
    %8 = vector.shape_cast %7 : vector<1x8x256xbf16> to vector<8x256xbf16>
    %cst_7 = arith.constant dense<0.000000e+00> : vector<8x128xf32>
    %9 = tpu.matmul %8, %0, %cst_7 {dimension_numbers = #tpu.dot_dimension_numbers<[1], [0], [0], [1], [0, 0, 1, 1], [], []>} : vector<8x256xbf16>, vector<256x128xbf16>, vector<8x128xf32> -> vector<8x128xf32>
    %cst_8 = arith.constant 0.000000e+00 : f32
    %10 = vector.broadcast %cst_8 : f32 to vector<8x128xf32>
    %11 = arith.maximumf %9, %10 : vector<8x128xf32>
    %12 = arith.truncf %11 : vector<8x128xf32> to vector<8x128xbf16>
    %13 = tpu.concatenate %6, %12 in 1 : vector<8x128xbf16>, vector<8x128xbf16> -> vector<8x256xbf16>
    %c0_9 = arith.constant 0 : index
    %c0_10 = arith.constant 0 : index
    %14 = vector.load %arg3[%c0_9, %c0_10] : memref<256x128xbf16, #tpu.memory_space<vmem>>, vector<256x128xbf16>
    %cst_11 = arith.constant dense<0.000000e+00> : vector<8x128xf32>
    %15 = tpu.matmul %13, %14, %cst_11 {dimension_numbers = #tpu.dot_dimension_numbers<[1], [0], [0], [1], [0, 0, 1, 1], [], []>} : vector<8x256xbf16>, vector<256x128xbf16>, vector<8x128xf32> -> vector<8x128xf32>
    %c0_12 = arith.constant 0 : index
    %c0_13 = arith.constant 0 : index
    %16 = vector.load %arg4[%c0_12, %c0_13] : memref<1x128xf32, #tpu.memory_space<vmem>>, vector<1x128xf32>
    %17 = vector.broadcast %16 : vector<1x128xf32> to vector<8x128xf32>
    %18 = arith.addf %15, %17 : vector<8x128xf32>
    %cst_14 = arith.constant dense<0xFF800000> : vector<8xf32>
    %19 = vector.multi_reduction <maximumf>, %18, %cst_14 [1] : vector<8x128xf32> to vector<8xf32>
    %20 = vector.shape_cast %19 : vector<8xf32> to vector<8x1xf32>
    %21 = vector.broadcast %20 : vector<8x1xf32> to vector<8x128xf32>
    %22 = arith.subf %18, %21 : vector<8x128xf32>
    %23 = math.exp %22 : vector<8x128xf32>
    %cst_15 = arith.constant dense<0.000000e+00> : vector<8xf32>
    %24 = vector.multi_reduction <add>, %23, %cst_15 [1] : vector<8x128xf32> to vector<8xf32>
    %25 = vector.shape_cast %24 : vector<8xf32> to vector<8x1xf32>
    %26 = tpu.reciprocal %25 {approx = true} : vector<8x1xf32> -> vector<8x1xf32>
    %27 = vector.broadcast %26 : vector<8x1xf32> to vector<8x128xf32>
    %28 = arith.mulf %23, %27 : vector<8x128xf32>
    %c0_16 = arith.constant 0 : index
    %c0_17 = arith.constant 0 : index
    %29 = vector.load %arg5[%c0_16, %c0_17] : memref<8x128xf32, #tpu.memory_space<vmem>>, vector<8x128xf32>
    tpu.vector_store %arg5[%c0_16, %c0_17], %28 {strides = array<i32>} : memref<8x128xf32, #tpu.memory_space<vmem>>, vector<8x128xf32>,
    return
  }
  func.func @transform_0(%arg0: i32) -> (i32, i32, i32) {
    %c0_i32 = arith.constant 0 : i32
    %c0_i32_0 = arith.constant 0 : i32
    %c0_i32_1 = arith.constant 0 : i32
    return %c0_i32, %arg0, %c0_i32_0 : i32, i32, i32
  }
  func.func @transform_1(%arg0: i32) -> (i32, i32) {
    %c0_i32 = arith.constant 0 : i32
    %c0_i32_0 = arith.constant 0 : i32
    %c0_i32_1 = arith.constant 0 : i32
    return %c0_i32, %c0_i32_0 : i32, i32
  }
  func.func @transform_2(%arg0: i32) -> (i32, i32) {
    %c0_i32 = arith.constant 0 : i32
    %c0_i32_0 = arith.constant 0 : i32
    %c0_i32_1 = arith.constant 0 : i32
    return %c0_i32, %c0_i32_0 : i32, i32
  }
  func.func @transform_3(%arg0: i32) -> (i32, i32) {
    %c0_i32 = arith.constant 0 : i32
    %c0_i32_0 = arith.constant 0 : i32
    %c0_i32_1 = arith.constant 0 : i32
    return %c0_i32, %c0_i32_0 : i32, i32
  }
  func.func @transform_4(%arg0: i32) -> (i32, i32) {
    %c0_i32 = arith.constant 0 : i32
    %c0_i32_0 = arith.constant 0 : i32
    return %arg0, %c0_i32 : i32, i32
  }
}

</mosaic_0001>

<llo_original>
// kernel: tpu_custom_call.1
$region0: #{tpu_custom_call.1}
  #allocation0 [shape = 'u32[]', space=smem, size = 0x4, offset = 0x4, fixed_abs, tag = 'smem constant byte address 0x4 - core index']
  #allocation1 [shape = 'u32[144,128]{1,0:T(1,128)}', space=vmem, size = 0x12000, scoped, tag = 'internal scratch']
  %s0 = inlined_call_operand.hbm [shape: bf16[2,8,256], index: 0, kind: input, shape index: {}]
  %s1 = inlined_call_operand.hbm [shape: bf16[256,128], index: 1, kind: input, shape index: {}]
  %s2 = inlined_call_operand.hbm [shape: bf16[256,128], index: 2, kind: input, shape index: {}]
  %s3 = inlined_call_operand.vmem [shape: f32[1,128], index: 3, kind: input, shape index: {}]
  %s4 = inlined_call_operand.hbm [shape: f32[8,128], index: 4, kind: output, shape index: {}]
  %s5 = sld [smem:[#allocation0]]
  $region38: #{tpu_custom_call.1} parent=0
    _
  %s7 = ssub.s32 1, %s5
  %s8 = scalar_select 0, %s7, %s5
  $region1: #{tpu_custom_call.1} parent=0
    #allocation2 [shape = 'u8[8192]{0}', space=vmem, size = 0x2000, scoped, tag = 'input window, operand 0, single buffered']
    #allocation3 [shape = 's32[1]{0}', space=sflag, size = 0x4, scoped, tag = 'scoped memory for tpu_custom_call.1']
    #allocation4 [shape = 's32[1]{0}', space=sflag, size = 0x4, scoped, tag = 'scoped memory for tpu_custom_call.1']
    #allocation5 [shape = 'u8[65536]{0}', space=vmem, size = 0x10000, scoped, tag = 'input window, operand 1, single buffered']
    #allocation6 [shape = 's32[1]{0}', space=sflag, size = 0x4, scoped, tag = 'scoped memory for tpu_custom_call.1']
    #allocation7 [shape = 'u8[65536]{0}', space=vmem, size = 0x10000, scoped, tag = 'input window, operand 2, single buffered']
    #allocation8 [shape = 'u8[4096]{0}', space=vmem, size = 0x1000, scoped, tag = 'output window, operand 0, single buffered']
    %9 = vsyncpa [#allocation3], 0
    %10 = vsyncpa [#allocation6], 0
    %11 = vsyncpa [#allocation4], 0
    // Predicated region
    $region2: #{tpu_custom_call.1} parent=1 // pred_check
      _
    $region3: #{tpu_custom_call.1} parent=1 // pred_check_branch
      %13 = sbr.rel (0) target = $region5
    $region4: #{tpu_custom_call.1} parent=1 // pred_region
      %s15 = ssub.s32 256, 256
      %16 = vsyncadd [#allocation3], %s15
      %s17 = sshll.u32 [#allocation2], 4
      %s18 = int_to_ptr.vmem [resolvable:$true] %s17
      %23 = dma.hbm_to_vmem [thread:$0]  %s0, 256, %s18, [#allocation3], 128, 128, 8
    $region5: #{tpu_custom_call.1} parent=1 // pred_fallthru
      _
    // Predicated region
    $region6: #{tpu_custom_call.1} parent=1 // pred_check
      _
    $region7: #{tpu_custom_call.1} parent=1 // pred_check_branch
      %25 = sbr.rel (0) target = $region9
    $region8: #{tpu_custom_call.1} parent=1 // pred_region
      %s27 = ssub.s32 2048, 2048
      %28 = vsyncadd [#allocation6], %s27
      %s29 = sshll.u32 [#allocation5], 4
      %s30 = int_to_ptr.vmem [resolvable:$true] %s29
      %35 = dma.hbm_to_vmem [thread:$0]  %s1, 2048, %s30, [#allocation6], 64, 64, 4
    $region9: #{tpu_custom_call.1} parent=1 // pred_fallthru
      _
    // Predicated region
    $region10: #{tpu_custom_call.1} parent=1 // pred_check
      _
    $region11: #{tpu_custom_call.1} parent=1 // pred_check_branch
      %37 = sbr.rel (0) target = $region13
    $region12: #{tpu_custom_call.1} parent=1 // pred_region
      %s39 = ssub.s32 2048, 2048
      %40 = vsyncadd [#allocation6], %s39
      %s41 = sshll.u32 [#allocation7], 4
      %s42 = int_to_ptr.vmem [resolvable:$true] %s41
      %47 = dma.hbm_to_vmem [thread:$0]  %s2, 2048, %s42, [#allocation6], 64, 64, 4
    $region13: #{tpu_custom_call.1} parent=1 // pred_fallthru
      _
    // Predicated region
    $region14: #{tpu_custom_call.1} parent=1 // pred_check
      _
    $region15: #{tpu_custom_call.1} parent=1 // pred_check_branch
      %49 = sbr.rel (0) target = $region17
    $region16: #{tpu_custom_call.1} parent=1 // pred_region
      _
    $region17: #{tpu_custom_call.1} parent=1 // pred_fallthru
      _
    // Predicated region
    $region18: #{tpu_custom_call.1} parent=1 // pred_check
      _
    $region19: #{tpu_custom_call.1} parent=1 // pred_check_branch
      %51 = sbr.rel (0) target = $region21
    $region20: #{tpu_custom_call.1} parent=1 // pred_region
      %52 = dma.done [#allocation3], 256
    $region21: #{tpu_custom_call.1} parent=1 // pred_fallthru
      _
    // Predicated region
    $region22: #{tpu_custom_call.1} parent=1 // pred_check
      _
    $region23: #{tpu_custom_call.1} parent=1 // pred_check_branch
      %54 = sbr.rel (0) target = $region25
    $region24: #{tpu_custom_call.1} parent=1 // pred_region
      %55 = dma.done [#allocation6], 2048
    $region25: #{tpu_custom_call.1} parent=1 // pred_fallthru
      _
    // Predicated region
    $region26: #{tpu_custom_call.1} parent=1 // pred_check
      _
    $region27: #{tpu_custom_call.1} parent=1 // pred_check_branch
      %57 = sbr.rel (0) target = $region29
    $region28: #{tpu_custom_call.1} parent=1 // pred_region
      %58 = dma.done [#allocation6], 2048
    $region29: #{tpu_custom_call.1} parent=1 // pred_fallthru
      _
    %v60 = vld [vmem:[#allocation5] sm:$0xf]
    %v61 = vld [vmem:[#allocation5 + $0x4] sm:$0xf]
    %v62 = vld [vmem:[#allocation5 + $0x8] sm:$0xf]
    %v63 = vld [vmem:[#allocation5 + $0xc] sm:$0xf]
    %v64 = vld [vmem:[#allocation5 + $0x10] sm:$0xf]
    %v65 = vld [vmem:[#allocation5 + $0x14] sm:$0xf]
    %v66 = vld [vmem:[#allocation5 + $0x18] sm:$0xf]
    %v67 = vld [vmem:[#allocation5 + $0x1c] sm:$0xf]
    %v68 = vld [vmem:[#allocation5 + $0x20] sm:$0xf]
    %v69 = vld [vmem:[#allocation5 + $0x24] sm:$0xf]
    %v70 = vld [vmem:[#allocation5 + $0x28] sm:$0xf]
    %v71 = vld [vmem:[#allocation5 + $0x2c] sm:$0xf]
    %v72 = vld [vmem:[#allocation5 + $0x30] sm:$0xf]
    %v73 = vld [vmem:[#allocation5 + $0x34] sm:$0xf]
    %v74 = vld [vmem:[#allocation5 + $0x38] sm:$0xf]
    %v75 = vld [vmem:[#allocation5 + $0x3c] sm:$0xf]
    %v76 = vld [vmem:[#allocation5 + $0x40] sm:$0xf]
    %v77 = vld [vmem:[#allocation5 + $0x44] sm:$0xf]
    %v78 = vld [vmem:[#allocation5 + $0x48] sm:$0xf]
    %v79 = vld [vmem:[#allocation5 + $0x4c] sm:$0xf]
    %v80 = vld [vmem:[#allocation5 + $0x50] sm:$0xf]
    %v81 = vld [vmem:[#allocation5 + $0x54] sm:$0xf]
    %v82 = vld [vmem:[#allocation5 + $0x58] sm:$0xf]
    %v83 = vld [vmem:[#allocation5 + $0x5c] sm:$0xf]
    %v84 = vld [vmem:[#allocation5 + $0x60] sm:$0xf]
    %v85 = vld [vmem:[#allocation5 + $0x64] sm:$0xf]
    %v86 = vld [vmem:[#allocation5 + $0x68] sm:$0xf]
    %v87 = vld [vmem:[#allocation5 + $0x6c] sm:$0xf]
    %v88 = vld [vmem:[#allocation5 + $0x70] sm:$0xf]
    %v89 = vld [vmem:[#allocation5 + $0x74] sm:$0xf]
    %v90 = vld [vmem:[#allocation5 + $0x78] sm:$0xf]
    %v91 = vld [vmem:[#allocation5 + $0x7c] sm:$0xf]
    %v92 = vld [vmem:[#allocation2] sm:$0xff]
    %v94 = vunpack.c.l.b16 %v92
    %v95 = vunpack.c.h.b16 %v92
    %v96 = vpack.c.b16 %v94, %v94
    %v97 = vpack.c.b16 %v95, %v95
    %v132 = vunpack.c.l.b16 %v60
    %v133 = vunpack.c.l.b16 %v61
    %v134 = vunpack.c.l.b16 %v62
    %v135 = vunpack.c.l.b16 %v63
    %v136 = vunpack.c.l.b16 %v64
    %v137 = vunpack.c.l.b16 %v65
    %v138 = vunpack.c.l.b16 %v66
    %v139 = vunpack.c.l.b16 %v67
    %v140 = vunpack.c.l.b16 %v68
    %v141 = vunpack.c.l.b16 %v69
    %v142 = vunpack.c.l.b16 %v70
    %v143 = vunpack.c.l.b16 %v71
    %v144 = vunpack.c.l.b16 %v72
    %v145 = vunpack.c.l.b16 %v73
    %v146 = vunpack.c.l.b16 %v74
    %v147 = vunpack.c.l.b16 %v75
    %v148 = vunpack.c.l.b16 %v76
    %v149 = vunpack.c.l.b16 %v77
    %v150 = vunpack.c.l.b16 %v78
    %v151 = vunpack.c.l.b16 %v79
    %v152 = vunpack.c.l.b16 %v80
    %v153 = vunpack.c.l.b16 %v81
    %v154 = vunpack.c.l.b16 %v82
    %v155 = vunpack.c.l.b16 %v83
    %v156 = vunpack.c.l.b16 %v84
    %v157 = vunpack.c.l.b16 %v85
    %v158 = vunpack.c.l.b16 %v86
    %v159 = vunpack.c.l.b16 %v87
    %v160 = vunpack.c.l.b16 %v88
    %v161 = vunpack.c.l.b16 %v89
    %v162 = vunpack.c.l.b16 %v90
    %v163 = vunpack.c.l.b16 %v91
    %v164 = vpack.c.b16 %v133, %v132
    %v165 = vpack.c.b16 %v135, %v134
    %v166 = vpack.c.b16 %v137, %v136
    %v167 = vpack.c.b16 %v139, %v138
    %v168 = vpack.c.b16 %v141, %v140
    %v169 = vpack.c.b16 %v143, %v142
    %v170 = vpack.c.b16 %v145, %v144
    %v171 = vpack.c.b16 %v147, %v146
    %v172 = vpack.c.b16 %v149, %v148
    %v173 = vpack.c.b16 %v151, %v150
    %v174 = vpack.c.b16 %v153, %v152
    %v175 = vpack.c.b16 %v155, %v154
    %v176 = vpack.c.b16 %v157, %v156
    %v177 = vpack.c.b16 %v159, %v158
    %v178 = vpack.c.b16 %v161, %v160
    %v179 = vpack.c.b16 %v163, %v162
    %196 = vmatprep.subr.bf16.mxu0 0
    %197 = vmatpush1.bf16.msra.mxu0 %v171
    %198 = vmatprep.subr.bf16.mxu0 0
    %199 = vmatpush1.bf16.msra.mxu0 %v170
    %200 = vmatprep.subr.bf16.mxu0 0
    %201 = vmatpush1.bf16.msra.mxu0 %v169
    %202 = vmatprep.subr.bf16.mxu0 0
    %203 = vmatpush1.bf16.msra.mxu0 %v168
    %204 = vmatprep.subr.bf16.mxu0 0
    %205 = vmatpush1.bf16.msra.mxu0 %v167
    %206 = vmatprep.subr.bf16.mxu0 0
    %207 = vmatpush1.bf16.msra.mxu0 %v166
    %208 = vmatprep.subr.bf16.mxu0 0
    %209 = vmatpush1.bf16.msra.mxu0 %v165
    %210 = vmatprep.subr.bf16.mxu0 0
    %211 = vmatpush1.bf16.msra.mxu0 %v164
    %212 = vmatprep.subr.bf16.mxu0 0
    %213 = vmatpush2.bf16.msra.mxu0 %v179
    %214 = vmatprep.subr.bf16.mxu0 0
    %215 = vmatpush2.bf16.msra.mxu0 %v178
    %216 = vmatprep.subr.bf16.mxu0 0
    %217 = vmatpush2.bf16.msra.mxu0 %v177
    %218 = vmatprep.subr.bf16.mxu0 0
    %219 = vmatpush2.bf16.msra.mxu0 %v176
    %220 = vmatprep.subr.bf16.mxu0 0
    %221 = vmatpush2.bf16.msra.mxu0 %v175
    %222 = vmatprep.subr.bf16.mxu0 0
    %223 = vmatpush2.bf16.msra.mxu0 %v174
    %224 = vmatprep.subr.bf16.mxu0 0
    %225 = vmatpush2.bf16.msra.mxu0 %v173
    %226 = vmatprep.subr.bf16.mxu0 0
    %227 = vmatpush2.bf16.msra.mxu0 %v172
    %228 = vmatprep.mubr.bf16.mxu0 %v97
    %229 = vmatmul.mubr.bf16.gmra.mxu0 %v96
    %v230 = vpop.f32.mrf.mxu0
    %v231 = vadd.f32 0.0, %v230
    %v232 = vpop.f32.mrf.mxu0
    %v233 = vpop.f32.mrf.mxu0
    %v234 = vpop.f32.mrf.mxu0
    %235 = vdwg.mxu0
    %v236 = vmax.f32 %v231, 0.0
    %v237 = vpack.c.bf16 %v236, %v236
    %s238 = scalar_lea.vmem [#allocation2], 8
    %v239 = vld [vmem:[%s238] sm:$0xff]
    %v241 = vunpack.c.l.b16 %v239
    %v242 = vunpack.c.h.b16 %v239
    %v243 = vpack.c.b16 %v241, %v241
    %v244 = vpack.c.b16 %v242, %v242
    %247 = vmatprep.subr.bf16.mxu0 0
    %248 = vmatpush1.bf16.msra.mxu0 %v171
    %249 = vmatprep.subr.bf16.mxu0 0
    %250 = vmatpush1.bf16.msra.mxu0 %v170
    %251 = vmatprep.subr.bf16.mxu0 0
    %252 = vmatpush1.bf16.msra.mxu0 %v169
    %253 = vmatprep.subr.bf16.mxu0 0
    %254 = vmatpush1.bf16.msra.mxu0 %v168
    %255 = vmatprep.subr.bf16.mxu0 0
    %256 = vmatpush1.bf16.msra.mxu0 %v167
    %257 = vmatprep.subr.bf16.mxu0 0
    %258 = vmatpush1.bf16.msra.mxu0 %v166
    %259 = vmatprep.subr.bf16.mxu0 0
    %260 = vmatpush1.bf16.msra.mxu0 %v165
    %261 = vmatprep.subr.bf16.mxu0 0
    %262 = vmatpush1.bf16.msra.mxu0 %v164
    %263 = vmatprep.subr.bf16.mxu0 0
    %264 = vmatpush2.bf16.msra.mxu0 %v179
    %265 = vmatprep.subr.bf16.mxu0 0
    %266 = vmatpush2.bf16.msra.mxu0 %v178
    %267 = vmatprep.subr.bf16.mxu0 0
    %268 = vmatpush2.bf16.msra.mxu0 %v177
    %269 = vmatprep.subr.bf16.mxu0 0
    %270 = vmatpush2.bf16.msra.mxu0 %v176
    %271 = vmatprep.subr.bf16.mxu0 0
    %272 = vmatpush2.bf16.msra.mxu0 %v175
    %273 = vmatprep.subr.bf16.mxu0 0
    %274 = vmatpush2.bf16.msra.mxu0 %v174
    %275 = vmatprep.subr.bf16.mxu0 0
    %276 = vmatpush2.bf16.msra.mxu0 %v173
    %277 = vmatprep.subr.bf16.mxu0 0
    %278 = vmatpush2.bf16.msra.mxu0 %v172
    %279 = vmatprep.mubr.bf16.mxu0 %v244
    %280 = vmatmul.mubr.bf16.gmra.mxu0 %v243
    %v281 = vpop.f32.mrf.mxu0
    %v282 = vadd.f32 0.0, %v281
    %v283 = vpop.f32.mrf.mxu0
    %v284 = vpop.f32.mrf.mxu0
    %v285 = vpop.f32.mrf.mxu0
    %286 = vdwg.mxu0
    %v287 = vmax.f32 %v282, 0.0
    %v288 = vpack.c.bf16 %v287, %v287
    %v289 = vld [vmem:[#allocation7] sm:$0xf]
    %v290 = vld [vmem:[#allocation7 + $0x4] sm:$0xf]
    %v291 = vld [vmem:[#allocation7 + $0x8] sm:$0xf]
    %v292 = vld [vmem:[#allocation7 + $0xc] sm:$0xf]
    %v293 = vld [vmem:[#allocation7 + $0x10] sm:$0xf]
    %v294 = vld [vmem:[#allocation7 + $0x14] sm:$0xf]
    %v295 = vld [vmem:[#allocation7 + $0x18] sm:$0xf]
    %v296 = vld [vmem:[#allocation7 + $0x1c] sm:$0xf]
    %v297 = vld [vmem:[#allocation7 + $0x20] sm:$0xf]
    %v298 = vld [vmem:[#allocation7 + $0x24] sm:$0xf]
    %v299 = vld [vmem:[#allocation7 + $0x28] sm:$0xf]
    %v300 = vld [vmem:[#allocation7 + $0x2c] sm:$0xf]
    %v301 = vld [vmem:[#allocation7 + $0x30] sm:$0xf]
    %v302 = vld [vmem:[#allocation7 + $0x34] sm:$0xf]
    %v303 = vld [vmem:[#allocation7 + $0x38] sm:$0xf]
    %v304 = vld [vmem:[#allocation7 + $0x3c] sm:$0xf]
    %v305 = vld [vmem:[#allocation7 + $0x40] sm:$0xf]
    %v306 = vld [vmem:[#allocation7 + $0x44] sm:$0xf]
    %v307 = vld [vmem:[#allocation7 + $0x48] sm:$0xf]
    %v308 = vld [vmem:[#allocation7 + $0x4c] sm:$0xf]
    %v309 = vld [vmem:[#allocation7 + $0x50] sm:$0xf]
    %v310 = vld [vmem:[#allocation7 + $0x54] sm:$0xf]
    %v311 = vld [vmem:[#allocation7 + $0x58] sm:$0xf]
    %v312 = vld [vmem:[#allocation7 + $0x5c] sm:$0xf]
    %v313 = vld [vmem:[#allocation7 + $0x60] sm:$0xf]
    %v314 = vld [vmem:[#allocation7 + $0x64] sm:$0xf]
    %v315 = vld [vmem:[#allocation7 + $0x68] sm:$0xf]
    %v316 = vld [vmem:[#allocation7 + $0x6c] sm:$0xf]
    %v317 = vld [vmem:[#allocation7 + $0x70] sm:$0xf]
    %v318 = vld [vmem:[#allocation7 + $0x74] sm:$0xf]
    %v319 = vld [vmem:[#allocation7 + $0x78] sm:$0xf]
    %v320 = vld [vmem:[#allocation7 + $0x7c] sm:$0xf]
    %v321 = vld [vmem:[%s3] sm:$0x1]
    %v323 = vlaneseq
    %v324 = vshrl.u32 %v323, 7
    %v325 = vsub.s32 0, %v324
    %v326 = vrot.slane %v321, %v325
    %v360 = vunpack.c.l.b16 %v289
    %v361 = vunpack.c.l.b16 %v290
    %v362 = vunpack.c.l.b16 %v291
    %v363 = vunpack.c.l.b16 %v292
    %v364 = vunpack.c.l.b16 %v293
    %v365 = vunpack.c.l.b16 %v294
    %v366 = vunpack.c.l.b16 %v295
    %v367 = vunpack.c.l.b16 %v296
    %v368 = vunpack.c.l.b16 %v297
    %v369 = vunpack.c.l.b16 %v298
    %v370 = vunpack.c.l.b16 %v299
    %v371 = vunpack.c.l.b16 %v300
    %v372 = vunpack.c.l.b16 %v301
    %v373 = vunpack.c.l.b16 %v302
    %v374 = vunpack.c.l.b16 %v303
    %v375 = vunpack.c.l.b16 %v304
    %v376 = vunpack.c.l.b16 %v305
    %v377 = vunpack.c.l.b16 %v306
    %v378 = vunpack.c.l.b16 %v307
    %v379 = vunpack.c.l.b16 %v308
    %v380 = vunpack.c.l.b16 %v309
    %v381 = vunpack.c.l.b16 %v310
    %v382 = vunpack.c.l.b16 %v311
    %v383 = vunpack.c.l.b16 %v312
    %v384 = vunpack.c.l.b16 %v313
    %v385 = vunpack.c.l.b16 %v314
    %v386 = vunpack.c.l.b16 %v315
    %v387 = vunpack.c.l.b16 %v316
    %v388 = vunpack.c.l.b16 %v317
    %v389 = vunpack.c.l.b16 %v318
    %v390 = vunpack.c.l.b16 %v319
    %v391 = vunpack.c.l.b16 %v320
    %v392 = vpack.c.b16 %v361, %v360
    %v393 = vpack.c.b16 %v363, %v362
    %v394 = vpack.c.b16 %v365, %v364
    %v395 = vpack.c.b16 %v367, %v366
    %v396 = vpack.c.b16 %v369, %v368
    %v397 = vpack.c.b16 %v371, %v370
    %v398 = vpack.c.b16 %v373, %v372
    %v399 = vpack.c.b16 %v375, %v374
    %v400 = vpack.c.b16 %v377, %v376
    %v401 = vpack.c.b16 %v379, %v378
    %v402 = vpack.c.b16 %v381, %v380
    %v403 = vpack.c.b16 %v383, %v382
    %v404 = vpack.c.b16 %v385, %v384
    %v405 = vpack.c.b16 %v387, %v386
    %v406 = vpack.c.b16 %v389, %v388
    %v407 = vpack.c.b16 %v391, %v390
    %424 = vmatprep.subr.bf16.mxu0 0
    %425 = vmatpush1.bf16.msra.mxu0 %v399
    %426 = vmatprep.subr.bf16.mxu0 0
    %427 = vmatpush1.bf16.msra.mxu0 %v398
    %428 = vmatprep.subr.bf16.mxu0 0
    %429 = vmatpush1.bf16.msra.mxu0 %v397
    %430 = vmatprep.subr.bf16.mxu0 0
    %431 = vmatpush1.bf16.msra.mxu0 %v396
    %432 = vmatprep.subr.bf16.mxu0 0
    %433 = vmatpush1.bf16.msra.mxu0 %v395
    %434 = vmatprep.subr.bf16.mxu0 0
    %435 = vmatpush1.bf16.msra.mxu0 %v394
    %436 = vmatprep.subr.bf16.mxu0 0
    %437 = vmatpush1.bf16.msra.mxu0 %v393
    %438 = vmatprep.subr.bf16.mxu0 0
    %439 = vmatpush1.bf16.msra.mxu0 %v392
    %440 = vmatprep.subr.bf16.mxu0 0
    %441 = vmatpush2.bf16.msra.mxu0 %v407
    %442 = vmatprep.subr.bf16.mxu0 0
    %443 = vmatpush2.bf16.msra.mxu0 %v406
    %444 = vmatprep.subr.bf16.mxu0 0
    %445 = vmatpush2.bf16.msra.mxu0 %v405
    %446 = vmatprep.subr.bf16.mxu0 0
    %447 = vmatpush2.bf16.msra.mxu0 %v404
    %448 = vmatprep.subr.bf16.mxu0 0
    %449 = vmatpush2.bf16.msra.mxu0 %v403
    %450 = vmatprep.subr.bf16.mxu0 0
    %451 = vmatpush2.bf16.msra.mxu0 %v402
    %452 = vmatprep.subr.bf16.mxu0 0
    %453 = vmatpush2.bf16.msra.mxu0 %v401
    %454 = vmatprep.subr.bf16.mxu0 0
    %455 = vmatpush2.bf16.msra.mxu0 %v400
    %456 = vmatprep.mubr.bf16.mxu0 %v288
    %457 = vmatmul.mubr.bf16.gmra.mxu0 %v237
    %v458 = vpop.f32.mrf.mxu0
    %v459 = vadd.f32 %v326, %v458
    %v460 = vpop.f32.mrf.mxu0
    %v461 = vpop.f32.mrf.mxu0
    %v462 = vpop.f32.mrf.mxu0
    %463 = vdwg.mxu0
    %464 = vmax.xlane.f32.xlu0 %v459
    %v465 = vpop.xlane.xlu0 %464
    %v466 = vsub.f32 %v459, %v465
    %v467 = vmul.f32 %v466, 1.442695
    %v468 = vpow.pop %v467
    %469 = vadd.xlane.f32.xlu0 %v468
    %v470 = vpop.xlane.xlu0 %469
    %v471 = vrcp.pop %v470
    %v472 = vmul.f32 %v468, %v471
    %473 = vst [vmem:[#allocation8] sm:$0xff] %v472
    // Predicated region
    $region30: #{tpu_custom_call.1} parent=1 // pred_check
      _
    $region31: #{tpu_custom_call.1} parent=1 // pred_check_branch
      %475 = sbr.rel (0) target = $region33
    $region32: #{tpu_custom_call.1} parent=1 // pred_region
      %s477 = ssub.s32 128, 128
      %478 = vsyncadd [#allocation4], %s477
      %s480 = sshll.u32 [#allocation8], 4
      %s481 = int_to_ptr.vmem [resolvable:$true] %s480
      %483 = dma.vmem_to_hbm [thread:$0]  %s481, 128, %s4, [#allocation4]
    $region33: #{tpu_custom_call.1} parent=1 // pred_fallthru
      _
    // Predicated region
    $region34: #{tpu_custom_call.1} parent=1 // pred_check
      _
    $region35: #{tpu_custom_call.1} parent=1 // pred_check_branch
      %485 = sbr.rel (0) target = $region37
    $region36: #{tpu_custom_call.1} parent=1 // pred_region
      %486 = dma.done [#allocation4], 128
    $region37: #{tpu_custom_call.1} parent=1 // pred_fallthru
      _
    %487 = vsyncpa [#allocation3], 1
    %488 = vsyncpa [#allocation6], 1
    %489 = vsyncpa [#allocation4], 1

</llo_original>
